<compile_context>
chip_gen: v6e
topology: v6e:2x2x1
jax: 0.10.0
libtpu: 0.0.40
codegen_flags: <defaults>
</compile_context>

<pallas_src>
import jax
import jax.numpy as jnp
from jax.experimental import pallas as pl
from jax.experimental.pallas import tpu as pltpu

_MIB = 1024 * 1024
_PART_SUB = 8        # sublane extent of each per-block partial-sum tile
_PART_LANES = 128    # lane extent (full vreg row -> unmasked stores)
_FAST_PATH_ELEMS = 256 * 1024


def _round_down(x, m):
    return (x // m) * m


def _sublane_align(itemsize):
    # Packed-sublane tile height: f32 -> 8, bf16 -> 16, int8/fp8 -> 32.
    return {4: 8, 2: 16, 1: 32}.get(itemsize, 8)


def _vmem_budget():
    """(per_input_block_bytes, vmem_limit_bytes), chosen per TPU generation."""
    try:
        cap = getattr(pltpu.get_tpu_info(), "vmem_capacity_bytes", 64 * _MIB)
    except Exception:  # interpret mode / unknown chip -> be conservative
        cap = 64 * _MIB
    if cap >= 96 * _MIB:          # v5e / v6e class: 128 MiB physical VMEM
        return 8 * _MIB, 64 * _MIB
    # v7x class: 64 MiB VMEM per core.  2 inputs x 2 buffers x 8 MiB = 32 MiB.
    return 8 * _MIB, 48 * _MIB


def _choose_flat_shape(total, hw):
    """Pick a lane-dense 2-D flattening (R, K) of `total` elements."""
    for cand in (4096, 2048, 1024, 512, 256, 128):
        if total % cand == 0:
            return total // cand, cand
    return total // hw, hw   # fallback: (N*C, H*W); K equals full dim -> legal


def _choose_row_tile(rows, k, itemsize, align, block_bytes):
    """Sublane-aligned row tile that fits block_bytes; prefers >= 2 equal blocks."""
    max_tile = max(align, _round_down(block_bytes // (itemsize * k), align))
    if rows <= max_tile and rows < 2 * align:
        return rows                       # too few rows to split: one full block
    # Force at least two grid steps so DMA pipelining / both v7x cores engage.
    max_tile = min(max_tile, max(align, _round_down(pl.cdiv(rows, 2), align)))
    for t in range(max_tile, 0, -align):  # prefer an aligned divisor (no ragged tail)
        if rows % t == 0:
            return t
    return max_tile                        # ragged tail handled by in-kernel mask


def _make_sse_kernel(valid_rows, tile_r):
    ragged = (valid_rows % tile_r) != 0

    def kernel(x_ref, t_ref, partial_ref):
        x = x_ref[...].astype(jnp.float32)
        t = t_ref[...].astype(jnp.float32)
        diff = x - t                                        # VPU elementwise
        if ragged:                                          # mask OOB rows of last block
            rid = pl.program_id(0) * tile_r + jax.lax.broadcasted_iota(
                jnp.int32, diff.shape, 0)
            diff = jnp.where(rid < valid_rows, diff, 0.0)
        sse = jnp.sum(diff * diff, keepdims=True)           # (1, 1) partial sum (XLU)
        partial_ref[...] = jnp.broadcast_to(sse, (_PART_SUB, _PART_LANES))

    return kernel


def content_loss_forward(x_nchw, target_nchw, weight):
    """JAX wrapper reproducing ContentLoss.forward.

    Returns (output, loss): output is `x_nchw` (identity passthrough) and
    loss == MSE(x * weight, target * weight).
    """
    N, C, H, W = x_nchw.shape
    total = N * C * H * W
    w = jnp.float32(weight)

    if total < _FAST_PATH_ELEMS:
        # Tiny feature maps: kernel launch overhead dominates; let XLA fuse it.
        diff = x_nchw.astype(jnp.float32) - target_nchw.astype(jnp.float32)
        loss = (w * w) * jnp.mean(diff * diff)
        return x_nchw, loss

    itemsize = jnp.dtype(x_nchw.dtype).itemsize
    align = _sublane_align(itemsize)
    block_bytes, vmem_limit = _vmem_budget()

    R, K = _choose_flat_shape(total, H * W)
    tile_r = _choose_row_tile(R, K, itemsize, align, block_bytes)
    grid_r = pl.cdiv(R, tile_r)

    x2d = x_nchw.reshape(R, K)
    t2d = target_nchw.reshape(R, K)

    bytes_in = total * (x2d.dtype.itemsize + t2d.dtype.itemsize)
    bytes_out = grid_r * _PART_SUB * _PART_LANES * 4
    cost = pl.CostEstimate(
        flops=3 * total, transcendentals=0, bytes_accessed=bytes_in + bytes_out)

    partials = pl.pallas_call(
        _make_sse_kernel(R, tile_r),
        out_shape=jax.ShapeDtypeStruct((grid_r * _PART_SUB, _PART_LANES), jnp.float32),
        grid=(grid_r,),
        in_specs=[
            pl.BlockSpec((tile_r, K), lambda i: (i, 0)),
            pl.BlockSpec((tile_r, K), lambda i: (i, 0)),
        ],
        out_specs=pl.BlockSpec((_PART_SUB, _PART_LANES), lambda i: (i, 0)),
        compiler_params=pltpu.CompilerParams(
            dimension_semantics=("parallel",),
            vmem_limit_bytes=vmem_limit,
        ),
        cost_estimate=cost,
    )(x2d, t2d)

    # One partial scalar per grid block (element 0 of each (8, 128) tile).
    sse_total = jnp.sum(partials.reshape(grid_r, _PART_SUB * _PART_LANES)[:, 0])
    loss = (w * w) * sse_total / jnp.float32(total)

    # output = input: pure passthrough, no copy / no extra HBM traffic.
    # TODO(synk): ContentLoss.backward() is training machinery; use jax.grad
    # over this wrapper instead of porting it.
    return x_nchw, loss


def _reference_loss(x, t, weight):
    xf = x.astype(jnp.float32)
    tf = t.astype(jnp.float32)
    return jnp.mean((xf * weight - tf * weight) ** 2)


if __name__ == "__main__":
    key = jax.random.PRNGKey(0)
    weight = 0.75
    k1, k2, k3, k4 = jax.random.split(key, 4)

    # 1) Small shape from the module spec -> exercises the plain-JAX fast path.
    x_small = jax.random.normal(k1, (2, 4, 16, 16), dtype=jnp.float32)
    t_small = jax.random.normal(k2, (2, 4, 16, 16), dtype=jnp.float32)
    out_s, loss_s = content_loss_forward(x_small, t_small, weight)
    jax.block_until_ready((out_s, loss_s))
    assert jnp.allclose(out_s, x_small), "passthrough output mismatch (small)"
    assert jnp.allclose(loss_s, _reference_loss(x_small, t_small, weight),
                        rtol=1e-5, atol=1e-6), "loss mismatch (small)"

    # 2) VGG-style conv feature map -> exercises the Pallas kernel path.
    x_big = jax.random.normal(k3, (2, 32, 64, 64), dtype=jnp.float32)
    t_big = jax.random.normal(k4, (2, 32, 64, 64), dtype=jnp.float32)
    out_b, loss_b = content_loss_forward(x_big, t_big, weight)
    out_b = jax.block_until_ready(out_b)
    loss_b = jax.block_until_ready(loss_b)
    assert jnp.allclose(out_b, x_big), "passthrough output mismatch (large)"
    assert jnp.allclose(loss_b, _reference_loss(x_big, t_big, weight),
                        rtol=1e-5, atol=1e-6), "loss mismatch (large)"

    # 3) Same features in bf16 -> exercises the dtype-aware tiling path.
    x_bf = x_big.astype(jnp.bfloat16)
    t_bf = t_big.astype(jnp.bfloat16)
    out_f, loss_f = content_loss_forward(x_bf, t_bf, weight)
    jax.block_until_ready((out_f, loss_f))
    assert jnp.allclose(loss_f, _reference_loss(x_bf, t_bf, weight),
                        rtol=1e-4, atol=1e-6), "loss mismatch (bf16)"

    print("KERNEL_OK")
</pallas_src>

<mosaic_0001>
module attributes {stable_mosaic.version = 11 : i64} {
  func.func @kernel(%arg0: i32, %arg1: memref<32x4096xf32, #tpu.memory_space<vmem>>, %arg2: memref<32x4096xf32, #tpu.memory_space<vmem>>, %arg3: memref<8x128xf32, #tpu.memory_space<vmem>>) attributes {dimension_semantics = [#tpu.dimension_semantics<parallel>], iteration_bounds = array<i64: 2>, scalar_prefetch = 0 : i64, scratch_operands = 0 : i64, tpu.core_type = #tpu.core_type<tc>, window_params = [{transform_indices = @transform_0, window_bounds = array<i64: 32, 4096>}, {transform_indices = @transform_1, window_bounds = array<i64: 32, 4096>}, {transform_indices = @transform_2, window_bounds = array<i64: 8, 128>}]} {
    %c0 = arith.constant 0 : index
    %c0_0 = arith.constant 0 : index
    %0 = vector.load %arg1[%c0, %c0_0] : memref<32x4096xf32, #tpu.memory_space<vmem>>, vector<32x4096xf32>
    %c0_1 = arith.constant 0 : index
    %c0_2 = arith.constant 0 : index
    %1 = vector.load %arg2[%c0_1, %c0_2] : memref<32x4096xf32, #tpu.memory_space<vmem>>, vector<32x4096xf32>
    %2 = arith.subf %0, %1 : vector<32x4096xf32>
    %3 = arith.mulf %2, %2 : vector<32x4096xf32>
    %4 = vector.shape_cast %3 : vector<32x4096xf32> to vector<1x32x4096xf32>
    %cst = arith.constant dense<0.000000e+00> : vector<1xf32>
    %5 = vector.multi_reduction <add>, %4, %cst [1, 2] : vector<1x32x4096xf32> to vector<1xf32>
    %6 = vector.shape_cast %5 : vector<1xf32> to vector<1x1x1xf32>
    %7 = vector.extract %6[0, 0, 0] : f32 from vector<1x1x1xf32>
    %8 = vector.broadcast %7 : f32 to vector<1x1xf32>
    %9 = vector.shape_cast %8 : vector<1x1xf32> to vector<1x1xf32>
    %10 = vector.broadcast %9 : vector<1x1xf32> to vector<8x128xf32>
    %c0_3 = arith.constant 0 : index
    %c0_4 = arith.constant 0 : index
    %11 = vector.load %arg3[%c0_3, %c0_4] : memref<8x128xf32, #tpu.memory_space<vmem>>, vector<8x128xf32>
    tpu.vector_store %arg3[%c0_3, %c0_4], %10 {strides = array<i32>} : memref<8x128xf32, #tpu.memory_space<vmem>>, vector<8x128xf32>,
    return
  }
  func.func @transform_0(%arg0: i32) -> (i32, i32) {
    %c0_i32 = arith.constant 0 : i32
    %c0_i32_0 = arith.constant 0 : i32
    return %arg0, %c0_i32 : i32, i32
  }
  func.func @transform_1(%arg0: i32) -> (i32, i32) {
    %c0_i32 = arith.constant 0 : i32
    %c0_i32_0 = arith.constant 0 : i32
    return %arg0, %c0_i32 : i32, i32
  }
  func.func @transform_2(%arg0: i32) -> (i32, i32) {
    %c0_i32 = arith.constant 0 : i32
    %c0_i32_0 = arith.constant 0 : i32
    return %arg0, %c0_i32 : i32, i32
  }
}

</mosaic_0001>

<llo_original>
// kernel: tpu_custom_call.1
$region0: #{tpu_custom_call.1}
  #allocation0 [shape = 'u32[]', space=smem, size = 0x4, offset = 0x4, fixed_abs, tag = 'smem constant byte address 0x4 - core index']
  #allocation1 [shape = 'u32[144,128]{1,0:T(1,128)}', space=vmem, size = 0x12000, scoped, tag = 'internal scratch']
  %s0 = inlined_call_operand.hbm [shape: f32[64,4096], index: 0, kind: input, shape index: {}]
  %s1 = inlined_call_operand.hbm [shape: f32[64,4096], index: 1, kind: input, shape index: {}]
  %s2 = inlined_call_operand.hbm [shape: f32[16,128], index: 2, kind: output, shape index: {}]
  %s3 = sld [smem:[#allocation0]]
  $region49: #{tpu_custom_call.1} parent=0
    _
  %s5 = ssub.s32 1, %s3
  %s6 = scalar_select 0, %s5, %s3
  $region1: #{tpu_custom_call.1} parent=0
    #allocation2 [shape = 'u8[1048576]{0}', space=vmem, size = 0x100000, scoped, tag = 'input window, operand 0']
    #allocation3 [shape = 's32[2]{0}', space=sflag, size = 0x8, scoped, tag = 'scoped memory for tpu_custom_call.1']
    #allocation4 [shape = 's32[2]{0}', space=sflag, size = 0x8, scoped, tag = 'scoped memory for tpu_custom_call.1']
    #allocation5 [shape = 'u8[1048576]{0}', space=vmem, size = 0x100000, scoped, tag = 'input window, operand 1']
    #allocation6 [shape = 's32[2]{0}', space=sflag, size = 0x8, scoped, tag = 'scoped memory for tpu_custom_call.1']
    #allocation7 [shape = 'u8[8192]{0}', space=vmem, size = 0x2000, scoped, tag = 'output window, operand 0']
    %7 = vsyncpa [#allocation3], 0
    %s8 = scalar_lea.sflag [#allocation3], 1
    %9 = vsyncpa %s8, 0
    %10 = vsyncpa [#allocation6], 0
    %s11 = scalar_lea.sflag [#allocation6], 1
    %12 = vsyncpa %s11, 0
    %13 = vsyncpa [#allocation4], 0
    %s14 = scalar_lea.sflag [#allocation4], 1
    %15 = vsyncpa %s14, 0
    loop: start=0, step=1, limit=4
    $region2: #{tpu_custom_call.1} parent=1 // loop_pre_header
      _
    $region3: #{tpu_custom_call.1} parent=1 // loop_header
      %s17 = sphi 0, %s21
      %p18 = scmp.ge.s32.totalorder %s17, 4
      %s27 = sphi 0, %s29
      %s30 = sphi 0, %s27
      %s31 = sphi 0, %s30
      %s47 = sphi 0, %s31
      %s53 = sphi 0, %s55
      %s56 = sphi 0, %s53
      %s57 = sphi 0, %s56
      %s73 = sphi 0, %s57
      %s79 = sphi 0, %s81
      %s82 = sphi 0, %s79
      %s83 = sphi 0, %s82
      %s99 = sphi 0, %s83
    $region4: #{tpu_custom_call.1} parent=1 // loop_header_branch
      %20 = sbr.rel (%p18) target = $region8
    $region5: #{tpu_custom_call.1} parent=1 // loop_body
      %s22 = ssub.s32 %s17, 1
      %s23 = ssub.s32 %s17, 2
      %s24 = sadd.s32 %s17, 1
      %s25 = ssub.s32 %s17, %s24
      %p26 = scmp.eq.s32.totalorder %s25, 0
      %s28 = sadd.s32 %s27, 1
      %s29 = scalar_select %p26, %s27, %s28
      %p32 = pneg %p26
      %p33 = scmp.eq.s32.totalorder %s17, 1
      %p34 = por %p32, %p33
      %p35 = scmp.ne.s32.totalorder %s27, %s30
      %p36 = scmp.eq.s32.totalorder %s17, 0
      %p37 = por %p35, %p36
      %p38 = scmp.ne.s32.totalorder %s27, %s30
      %p39 = scmp.eq.s32.totalorder %s22, 1
      %p40 = por %p38, %p39
      %p41 = scmp.ne.s32.totalorder %s30, %s31
      %p42 = scmp.eq.s32.totalorder %s22, 0
      %p43 = por %p41, %p42
      %p44 = scmp.ne.s32.totalorder %s30, %s31
      %p45 = scmp.eq.s32.totalorder %s23, 1
      %p46 = por %p44, %p45
      %p48 = scmp.ne.s32.totalorder %s31, %s47
      %p49 = scmp.eq.s32.totalorder %s23, 0
      %p50 = por %p48, %p49
      %s51 = ssub.s32 %s17, %s24
      %p52 = scmp.eq.s32.totalorder %s51, 0
      %s54 = sadd.s32 %s53, 1
      %s55 = scalar_select %p52, %s53, %s54
      %p58 = pneg %p52
      %p59 = scmp.eq.s32.totalorder %s17, 1
      %p60 = por %p58, %p59
      %p61 = scmp.ne.s32.totalorder %s53, %s56
      %p62 = scmp.eq.s32.totalorder %s17, 0
      %p63 = por %p61, %p62
      %p64 = scmp.ne.s32.totalorder %s53, %s56
      %p65 = scmp.eq.s32.totalorder %s22, 1
      %p66 = por %p64, %p65
      %p67 = scmp.ne.s32.totalorder %s56, %s57
      %p68 = scmp.eq.s32.totalorder %s22, 0
      %p69 = por %p67, %p68
      %p70 = scmp.ne.s32.totalorder %s56, %s57
      %p71 = scmp.eq.s32.totalorder %s23, 1
      %p72 = por %p70, %p71
      %p74 = scmp.ne.s32.totalorder %s57, %s73
      %p75 = scmp.eq.s32.totalorder %s23, 0
      %p76 = por %p74, %p75
      %s77 = ssub.s32 %s17, %s24
      %p78 = scmp.eq.s32.totalorder %s77, 0
      %s80 = sadd.s32 %s79, 1
      %s81 = scalar_select %p78, %s79, %s80
      %p84 = pneg %p78
      %p85 = scmp.eq.s32.totalorder %s17, 1
      %p86 = por %p84, %p85
      %p87 = scmp.ne.s32.totalorder %s79, %s82
      %p88 = scmp.eq.s32.totalorder %s17, 0
      %p89 = por %p87, %p88
      %p90 = scmp.ne.s32.totalorder %s79, %s82
      %p91 = scmp.eq.s32.totalorder %s22, 1
      %p92 = por %p90, %p91
      %p93 = scmp.ne.s32.totalorder %s82, %s83
      %p94 = scmp.eq.s32.totalorder %s22, 0
      %p95 = por %p93, %p94
      %p96 = scmp.ne.s32.totalorder %s82, %s83
      %p97 = scmp.eq.s32.totalorder %s23, 1
      %p98 = por %p96, %p97
      %p100 = scmp.ne.s32.totalorder %s83, %s99
      %p101 = scmp.eq.s32.totalorder %s23, 0
      %p102 = por %p100, %p101
      %p103 = scmp.le.s32.totalorder 1, %s17
      %p104 = scmp.lt.s32.totalorder %s17, 3
      %p105 = pnand %p103, %p104
      %p106 = pneg %p105
      // Predicated region
      $region9: #{tpu_custom_call.1} parent=5 // pred_check
        _
      $region10: #{tpu_custom_call.1} parent=5 // pred_check_branch
        %108 = sbr.rel (%p105) target = $region12
      $region11: #{tpu_custom_call.1} parent=5 // pred_region
        %s109 = ssub.s32 %s17, 1
      $region12: #{tpu_custom_call.1} parent=5 // pred_fallthru
        _
      %p110 = scmp.lt.s32.totalorder %s17, 2
      // Predicated region
      $region13: #{tpu_custom_call.1} parent=5 // pred_check
        %p111 = pneg %p110
      $region14: #{tpu_custom_call.1} parent=5 // pred_check_branch
        %113 = sbr.rel (%p111) target = $region16
      $region15: #{tpu_custom_call.1} parent=5 // pred_region
        // Predicated region
        $region17: #{tpu_custom_call.1} parent=15 // pred_check
          %p114 = pneg %p37
        $region18: #{tpu_custom_call.1} parent=15 // pred_check_branch
          %116 = sbr.rel (%p114) target = $region20
        $region19: #{tpu_custom_call.1} parent=15 // pred_region
          %s117 = sand.u32 %s27, 1
          %s118 = scalar_lea.sflag [#allocation3], %s117
          %s119 = sand.u32 %s27, 1
          %s120 = smul.addr %s119, 1024
          %s121 = scalar_lea.vmem [#allocation2], %s120
          %s122 = smul.u32 4, %s17
          %s124 = ssub.s32 16384, 16384
          %125 = vsyncadd %s118, %s124
          %s126 = smul.addr %s122, 32
          %s127 = smul.addr %s126, 128
          %s128 = scalar_lea.hbm %s0, %s127
          %s129 = sshll.u32 %s121, 4
          %s130 = int_to_ptr.vmem [resolvable:$true] %s129
          %135 = dma.hbm_to_vmem [thread:$0]  %s128, 16384, %s130, %s118, 4096, 4096, 256
        $region20: #{tpu_custom_call.1} parent=15 // pred_fallthru
          _
        // Predicated region
        $region21: #{tpu_custom_call.1} parent=15 // pred_check
          %p136 = pneg %p63
        $region22: #{tpu_custom_call.1} parent=15 // pred_check_branch
          %138 = sbr.rel (%p136) target = $region24
        $region23: #{tpu_custom_call.1} parent=15 // pred_region
          %s139 = sand.u32 %s53, 1
          %s140 = scalar_lea.sflag [#allocation6], %s139
          %s141 = sand.u32 %s53, 1
          %s142 = smul.addr %s141, 1024
          %s143 = scalar_lea.vmem [#allocation5], %s142
          %s144 = smul.u32 4, %s17
          %s146 = ssub.s32 16384, 16384
          %147 = vsyncadd %s140, %s146
          %s148 = smul.addr %s144, 32
          %s149 = smul.addr %s148, 128
          %s150 = scalar_lea.hbm %s1, %s149
          %s151 = sshll.u32 %s143, 4
          %s152 = int_to_ptr.vmem [resolvable:$true] %s151
          %157 = dma.hbm_to_vmem [thread:$0]  %s150, 16384, %s152, %s140, 4096, 4096, 256
        $region24: #{tpu_custom_call.1} parent=15 // pred_fallthru
          _
      $region16: #{tpu_custom_call.1} parent=5 // pred_fallthru
        _
      %p158 = scmp.le.s32.totalorder 1, %s17
      %p159 = scmp.lt.s32.totalorder %s17, 3
      %p160 = pnand %p158, %p159
      %p161 = pneg %p160
      // Predicated region
      $region25: #{tpu_custom_call.1} parent=5 // pred_check
        _
      $region26: #{tpu_custom_call.1} parent=5 // pred_check_branch
        %163 = sbr.rel (%p160) target = $region28
      $region27: #{tpu_custom_call.1} parent=5 // pred_region
        %s164 = ssub.s32 %s17, 1
        %s165 = sand.u32 %s30, 1
        %s166 = scalar_lea.sflag [#allocation3], %s165
        %s167 = sand.u32 %s30, 1
        %s168 = smul.addr %s167, 1024
        %s169 = scalar_lea.vmem [#allocation2], %s168
        // Predicated region
        $region29: #{tpu_custom_call.1} parent=27 // pred_check
          %p170 = pneg %p43
        $region30: #{tpu_custom_call.1} parent=27 // pred_check_branch
          %172 = sbr.rel (%p170) target = $region32
        $region31: #{tpu_custom_call.1} parent=27 // pred_region
          %173 = dma.done %s166, 16384
        $region32: #{tpu_custom_call.1} parent=27 // pred_fallthru
          _
        %s174 = sand.u32 %s56, 1
        %s175 = scalar_lea.sflag [#allocation6], %s174
        %s176 = sand.u32 %s56, 1
        %s177 = smul.addr %s176, 1024
        %s178 = scalar_lea.vmem [#allocation5], %s177
        // Predicated region
        $region33: #{tpu_custom_call.1} parent=27 // pred_check
          %p179 = pneg %p69
        $region34: #{tpu_custom_call.1} parent=27 // pred_check_branch
          %181 = sbr.rel (%p179) target = $region36
        $region35: #{tpu_custom_call.1} parent=27 // pred_region
          %182 = dma.done %s175, 16384
        $region36: #{tpu_custom_call.1} parent=27 // pred_fallthru
          _
        %s183 = sand.u32 %s30, 1
        %s184 = scalar_lea.sflag [#allocation3], %s183
        %s185 = sand.u32 %s30, 1
        %s186 = smul.addr %s185, 1024
        %s187 = scalar_lea.vmem [#allocation2], %s186
        %p188 = pneg %p43
        %p189 = pneg %p40
        %s190 = sand.u32 %s56, 1
        %s191 = scalar_lea.sflag [#allocation6], %s190
        %s192 = sand.u32 %s56, 1
        %s193 = smul.addr %s192, 1024
        %s194 = scalar_lea.vmem [#allocation5], %s193
        %p195 = pneg %p69
        %p196 = pneg %p66
        %p197 = pneg %p95
        %p198 = pneg %p92
        %s199 = sand.u32 %s82, 1
        %s200 = scalar_lea.sflag [#allocation4], %s199
        %s201 = sand.u32 %s82, 1
        %s202 = smul.addr %s201, 8
        %s203 = scalar_lea.vmem [#allocation7], %s202
        %s204 = smul.u32 4, %s22
        %s205 = smul.u32 4, %s22
        %v206 = vld [vmem:[%s169] sm:$0xff]
        %v207 = vld [vmem:[%s169 + $0x8] sm:$0xff]
        %v208 = vld [vmem:[%s169 + $0x10] sm:$0xff]
        %v209 = vld [vmem:[%s169 + $0x18] sm:$0xff]
        %v210 = vld [vmem:[%s169 + $0x20] sm:$0xff]
        %v211 = vld [vmem:[%s169 + $0x28] sm:$0xff]
        %v212 = vld [vmem:[%s169 + $0x30] sm:$0xff]
        %v213 = vld [vmem:[%s169 + $0x38] sm:$0xff]
        %v214 = vld [vmem:[%s169 + $0x40] sm:$0xff]
        %v215 = vld [vmem:[%s169 + $0x48] sm:$0xff]
        %v216 = vld [vmem:[%s169 + $0x50] sm:$0xff]
        %v217 = vld [vmem:[%s169 + $0x58] sm:$0xff]
        %v218 = vld [vmem:[%s169 + $0x60] sm:$0xff]
        %v219 = vld [vmem:[%s169 + $0x68] sm:$0xff]
        %v220 = vld [vmem:[%s169 + $0x70] sm:$0xff]
        %v221 = vld [vmem:[%s169 + $0x78] sm:$0xff]
        %v222 = vld [vmem:[%s169 + $0x80] sm:$0xff]
        %v223 = vld [vmem:[%s169 + $0x88] sm:$0xff]
        %v224 = vld [vmem:[%s169 + $0x90] sm:$0xff]
        %v225 = vld [vmem:[%s169 + $0x98] sm:$0xff]
        %v226 = vld [vmem:[%s169 + $0xa0] sm:$0xff]
        %v227 = vld [vmem:[%s169 + $0xa8] sm:$0xff]
        %v228 = vld [vmem:[%s169 + $0xb0] sm:$0xff]
        %v229 = vld [vmem:[%s169 + $0xb8] sm:$0xff]
        %v230 = vld [vmem:[%s169 + $0xc0] sm:$0xff]
        %v231 = vld [vmem:[%s169 + $0xc8] sm:$0xff]
        %v232 = vld [vmem:[%s169 + $0xd0] sm:$0xff]
        %v233 = vld [vmem:[%s169 + $0xd8] sm:$0xff]
        %v234 = vld [vmem:[%s169 + $0xe0] sm:$0xff]
        %v235 = vld [vmem:[%s169 + $0xe8] sm:$0xff]
        %v236 = vld [vmem:[%s169 + $0xf0] sm:$0xff]
        %v237 = vld [vmem:[%s169 + $0xf8] sm:$0xff]
        %v238 = vld [vmem:[%s169 + $0x100] sm:$0xff]
        %v239 = vld [vmem:[%s169 + $0x108] sm:$0xff]
        %v240 = vld [vmem:[%s169 + $0x110] sm:$0xff]
        %v241 = vld [vmem:[%s169 + $0x118] sm:$0xff]
        %v242 = vld [vmem:[%s169 + $0x120] sm:$0xff]
        %v243 = vld [vmem:[%s169 + $0x128] sm:$0xff]
        %v244 = vld [vmem:[%s169 + $0x130] sm:$0xff]
        %v245 = vld [vmem:[%s169 + $0x138] sm:$0xff]
        %v246 = vld [vmem:[%s169 + $0x140] sm:$0xff]
        %v247 = vld [vmem:[%s169 + $0x148] sm:$0xff]
        %v248 = vld [vmem:[%s169 + $0x150] sm:$0xff]
        %v249 = vld [vmem:[%s169 + $0x158] sm:$0xff]
        %v250 = vld [vmem:[%s169 + $0x160] sm:$0xff]
        %v251 = vld [vmem:[%s169 + $0x168] sm:$0xff]
        %v252 = vld [vmem:[%s169 + $0x170] sm:$0xff]
        %v253 = vld [vmem:[%s169 + $0x178] sm:$0xff]
        %v254 = vld [vmem:[%s169 + $0x180] sm:$0xff]
        %v255 = vld [vmem:[%s169 + $0x188] sm:$0xff]
        %v256 = vld [vmem:[%s169 + $0x190] sm:$0xff]
        %v257 = vld [vmem:[%s169 + $0x198] sm:$0xff]
        %v258 = vld [vmem:[%s169 + $0x1a0] sm:$0xff]
        %v259 = vld [vmem:[%s169 + $0x1a8] sm:$0xff]
        %v260 = vld [vmem:[%s169 + $0x1b0] sm:$0xff]
        %v261 = vld [vmem:[%s169 + $0x1b8] sm:$0xff]
        %v262 = vld [vmem:[%s169 + $0x1c0] sm:$0xff]
        %v263 = vld [vmem:[%s169 + $0x1c8] sm:$0xff]
        %v264 = vld [vmem:[%s169 + $0x1d0] sm:$0xff]
        %v265 = vld [vmem:[%s169 + $0x1d8] sm:$0xff]
        %v266 = vld [vmem:[%s169 + $0x1e0] sm:$0xff]
        %v267 = vld [vmem:[%s169 + $0x1e8] sm:$0xff]
        %v268 = vld [vmem:[%s169 + $0x1f0] sm:$0xff]
        %v269 = vld [vmem:[%s169 + $0x1f8] sm:$0xff]
        %v270 = vld [vmem:[%s169 + $0x200] sm:$0xff]
        %v271 = vld [vmem:[%s169 + $0x208] sm:$0xff]
        %v272 = vld [vmem:[%s169 + $0x210] sm:$0xff]
        %v273 = vld [vmem:[%s169 + $0x218] sm:$0xff]
        %v274 = vld [vmem:[%s169 + $0x220] sm:$0xff]
        %v275 = vld [vmem:[%s169 + $0x228] sm:$0xff]
        %v276 = vld [vmem:[%s169 + $0x230] sm:$0xff]
        %v277 = vld [vmem:[%s169 + $0x238] sm:$0xff]
        %v278 = vld [vmem:[%s169 + $0x240] sm:$0xff]
        %v279 = vld [vmem:[%s169 + $0x248] sm:$0xff]
        %v280 = vld [vmem:[%s169 + $0x250] sm:$0xff]
        %v281 = vld [vmem:[%s169 + $0x258] sm:$0xff]
        %v282 = vld [vmem:[%s169 + $0x260] sm:$0xff]
        %v283 = vld [vmem:[%s169 + $0x268] sm:$0xff]
        %v284 = vld [vmem:[%s169 + $0x270] sm:$0xff]
        %v285 = vld [vmem:[%s169 + $0x278] sm:$0xff]
        %v286 = vld [vmem:[%s169 + $0x280] sm:$0xff]
        %v287 = vld [vmem:[%s169 + $0x288] sm:$0xff]
        %v288 = vld [vmem:[%s169 + $0x290] sm:$0xff]
        %v289 = vld [vmem:[%s169 + $0x298] sm:$0xff]
        %v290 = vld [vmem:[%s169 + $0x2a0] sm:$0xff]
        %v291 = vld [vmem:[%s169 + $0x2a8] sm:$0xff]
        %v292 = vld [vmem:[%s169 + $0x2b0] sm:$0xff]
        %v293 = vld [vmem:[%s169 + $0x2b8] sm:$0xff]
        %v294 = vld [vmem:[%s169 + $0x2c0] sm:$0xff]
        %v295 = vld [vmem:[%s169 + $0x2c8] sm:$0xff]
        %v296 = vld [vmem:[%s169 + $0x2d0] sm:$0xff]
        %v297 = vld [vmem:[%s169 + $0x2d8] sm:$0xff]
        %v298 = vld [vmem:[%s169 + $0x2e0] sm:$0xff]
        %v299 = vld [vmem:[%s169 + $0x2e8] sm:$0xff]
        %v300 = vld [vmem:[%s169 + $0x2f0] sm:$0xff]
        %v301 = vld [vmem:[%s169 + $0x2f8] sm:$0xff]
        %v302 = vld [vmem:[%s169 + $0x300] sm:$0xff]
        %v303 = vld [vmem:[%s169 + $0x308] sm:$0xff]
        %v304 = vld [vmem:[%s169 + $0x310] sm:$0xff]
        %v305 = vld [vmem:[%s169 + $0x318] sm:$0xff]
        %v306 = vld [vmem:[%s169 + $0x320] sm:$0xff]
        %v307 = vld [vmem:[%s169 + $0x328] sm:$0xff]
        %v308 = vld [vmem:[%s169 + $0x330] sm:$0xff]
        %v309 = vld [vmem:[%s169 + $0x338] sm:$0xff]
        %v310 = vld [vmem:[%s169 + $0x340] sm:$0xff]
        %v311 = vld [vmem:[%s169 + $0x348] sm:$0xff]
        %v312 = vld [vmem:[%s169 + $0x350] sm:$0xff]
        %v313 = vld [vmem:[%s169 + $0x358] sm:$0xff]
        %v314 = vld [vmem:[%s169 + $0x360] sm:$0xff]
        %v315 = vld [vmem:[%s169 + $0x368] sm:$0xff]
        %v316 = vld [vmem:[%s169 + $0x370] sm:$0xff]
        %v317 = vld [vmem:[%s169 + $0x378] sm:$0xff]
        %v318 = vld [vmem:[%s169 + $0x380] sm:$0xff]
        %v319 = vld [vmem:[%s169 + $0x388] sm:$0xff]
        %v320 = vld [vmem:[%s169 + $0x390] sm:$0xff]
        %v321 = vld [vmem:[%s169 + $0x398] sm:$0xff]
        %v322 = vld [vmem:[%s169 + $0x3a0] sm:$0xff]
        %v323 = vld [vmem:[%s169 + $0x3a8] sm:$0xff]
        %v324 = vld [vmem:[%s169 + $0x3b0] sm:$0xff]
        %v325 = vld [vmem:[%s169 + $0x3b8] sm:$0xff]
        %v326 = vld [vmem:[%s169 + $0x3c0] sm:$0xff]
        %v327 = vld [vmem:[%s169 + $0x3c8] sm:$0xff]
        %v328 = vld [vmem:[%s169 + $0x3d0] sm:$0xff]
        %v329 = vld [vmem:[%s169 + $0x3d8] sm:$0xff]
        %v330 = vld [vmem:[%s169 + $0x3e0] sm:$0xff]
        %v331 = vld [vmem:[%s169 + $0x3e8] sm:$0xff]
        %v332 = vld [vmem:[%s169 + $0x3f0] sm:$0xff]
        %v333 = vld [vmem:[%s169 + $0x3f8] sm:$0xff]
        %v334 = vld [vmem:[%s178] sm:$0xff]
        %v335 = vld [vmem:[%s178 + $0x8] sm:$0xff]
        %v336 = vld [vmem:[%s178 + $0x10] sm:$0xff]
        %v337 = vld [vmem:[%s178 + $0x18] sm:$0xff]
        %v338 = vld [vmem:[%s178 + $0x20] sm:$0xff]
        %v339 = vld [vmem:[%s178 + $0x28] sm:$0xff]
        %v340 = vld [vmem:[%s178 + $0x30] sm:$0xff]
        %v341 = vld [vmem:[%s178 + $0x38] sm:$0xff]
        %v342 = vld [vmem:[%s178 + $0x40] sm:$0xff]
        %v343 = vld [vmem:[%s178 + $0x48] sm:$0xff]
        %v344 = vld [vmem:[%s178 + $0x50] sm:$0xff]
        %v345 = vld [vmem:[%s178 + $0x58] sm:$0xff]
        %v346 = vld [vmem:[%s178 + $0x60] sm:$0xff]
        %v347 = vld [vmem:[%s178 + $0x68] sm:$0xff]
        %v348 = vld [vmem:[%s178 + $0x70] sm:$0xff]
        %v349 = vld [vmem:[%s178 + $0x78] sm:$0xff]
        %v350 = vld [vmem:[%s178 + $0x80] sm:$0xff]
        %v351 = vld [vmem:[%s178 + $0x88] sm:$0xff]
        %v352 = vld [vmem:[%s178 + $0x90] sm:$0xff]
        %v353 = vld [vmem:[%s178 + $0x98] sm:$0xff]
        %v354 = vld [vmem:[%s178 + $0xa0] sm:$0xff]
        %v355 = vld [vmem:[%s178 + $0xa8] sm:$0xff]
        %v356 = vld [vmem:[%s178 + $0xb0] sm:$0xff]
        %v357 = vld [vmem:[%s178 + $0xb8] sm:$0xff]
        %v358 = vld [vmem:[%s178 + $0xc0] sm:$0xff]
        %v359 = vld [vmem:[%s178 + $0xc8] sm:$0xff]
        %v360 = vld [vmem:[%s178 + $0xd0] sm:$0xff]
        %v361 = vld [vmem:[%s178 + $0xd8] sm:$0xff]
        %v362 = vld [vmem:[%s178 + $0xe0] sm:$0xff]
        %v363 = vld [vmem:[%s178 + $0xe8] sm:$0xff]
        %v364 = vld [vmem:[%s178 + $0xf0] sm:$0xff]
        %v365 = vld [vmem:[%s178 + $0xf8] sm:$0xff]
        %v366 = vld [vmem:[%s178 + $0x100] sm:$0xff]
        %v367 = vld [vmem:[%s178 + $0x108] sm:$0xff]
        %v368 = vld [vmem:[%s178 + $0x110] sm:$0xff]
        %v369 = vld [vmem:[%s178 + $0x118] sm:$0xff]
        %v370 = vld [vmem:[%s178 + $0x120] sm:$0xff]
        %v371 = vld [vmem:[%s178 + $0x128] sm:$0xff]
        %v372 = vld [vmem:[%s178 + $0x130] sm:$0xff]
        %v373 = vld [vmem:[%s178 + $0x138] sm:$0xff]
        %v374 = vld [vmem:[%s178 + $0x140] sm:$0xff]
        %v375 = vld [vmem:[%s178 + $0x148] sm:$0xff]
        %v376 = vld [vmem:[%s178 + $0x150] sm:$0xff]
        %v377 = vld [vmem:[%s178 + $0x158] sm:$0xff]
        %v378 = vld [vmem:[%s178 + $0x160] sm:$0xff]
        %v379 = vld [vmem:[%s178 + $0x168] sm:$0xff]
        %v380 = vld [vmem:[%s178 + $0x170] sm:$0xff]
        %v381 = vld [vmem:[%s178 + $0x178] sm:$0xff]
        %v382 = vld [vmem:[%s178 + $0x180] sm:$0xff]
        %v383 = vld [vmem:[%s178 + $0x188] sm:$0xff]
        %v384 = vld [vmem:[%s178 + $0x190] sm:$0xff]
        %v385 = vld [vmem:[%s178 + $0x198] sm:$0xff]
        %v386 = vld [vmem:[%s178 + $0x1a0] sm:$0xff]
        %v387 = vld [vmem:[%s178 + $0x1a8] sm:$0xff]
        %v388 = vld [vmem:[%s178 + $0x1b0] sm:$0xff]
        %v389 = vld [vmem:[%s178 + $0x1b8] sm:$0xff]
        %v390 = vld [vmem:[%s178 + $0x1c0] sm:$0xff]
        %v391 = vld [vmem:[%s178 + $0x1c8] sm:$0xff]
        %v392 = vld [vmem:[%s178 + $0x1d0] sm:$0xff]
        %v393 = vld [vmem:[%s178 + $0x1d8] sm:$0xff]
        %v394 = vld [vmem:[%s178 + $0x1e0] sm:$0xff]
        %v395 = vld [vmem:[%s178 + $0x1e8] sm:$0xff]
        %v396 = vld [vmem:[%s178 + $0x1f0] sm:$0xff]
        %v397 = vld [vmem:[%s178 + $0x1f8] sm:$0xff]
        %v398 = vld [vmem:[%s178 + $0x200] sm:$0xff]
        %v399 = vld [vmem:[%s178 + $0x208] sm:$0xff]
        %v400 = vld [vmem:[%s178 + $0x210] sm:$0xff]
        %v401 = vld [vmem:[%s178 + $0x218] sm:$0xff]
        %v402 = vld [vmem:[%s178 + $0x220] sm:$0xff]
        %v403 = vld [vmem:[%s178 + $0x228] sm:$0xff]
        %v404 = vld [vmem:[%s178 + $0x230] sm:$0xff]
        %v405 = vld [vmem:[%s178 + $0x238] sm:$0xff]
        %v406 = vld [vmem:[%s178 + $0x240] sm:$0xff]
        %v407 = vld [vmem:[%s178 + $0x248] sm:$0xff]
        %v408 = vld [vmem:[%s178 + $0x250] sm:$0xff]
        %v409 = vld [vmem:[%s178 + $0x258] sm:$0xff]
        %v410 = vld [vmem:[%s178 + $0x260] sm:$0xff]
        %v411 = vld [vmem:[%s178 + $0x268] sm:$0xff]
        %v412 = vld [vmem:[%s178 + $0x270] sm:$0xff]
        %v413 = vld [vmem:[%s178 + $0x278] sm:$0xff]
        %v414 = vld [vmem:[%s178 + $0x280] sm:$0xff]
        %v415 = vld [vmem:[%s178 + $0x288] sm:$0xff]
        %v416 = vld [vmem:[%s178 + $0x290] sm:$0xff]
        %v417 = vld [vmem:[%s178 + $0x298] sm:$0xff]
        %v418 = vld [vmem:[%s178 + $0x2a0] sm:$0xff]
        %v419 = vld [vmem:[%s178 + $0x2a8] sm:$0xff]
        %v420 = vld [vmem:[%s178 + $0x2b0] sm:$0xff]
        %v421 = vld [vmem:[%s178 + $0x2b8] sm:$0xff]
        %v422 = vld [vmem:[%s178 + $0x2c0] sm:$0xff]
        %v423 = vld [vmem:[%s178 + $0x2c8] sm:$0xff]
        %v424 = vld [vmem:[%s178 + $0x2d0] sm:$0xff]
        %v425 = vld [vmem:[%s178 + $0x2d8] sm:$0xff]
        %v426 = vld [vmem:[%s178 + $0x2e0] sm:$0xff]
        %v427 = vld [vmem:[%s178 + $0x2e8] sm:$0xff]
        %v428 = vld [vmem:[%s178 + $0x2f0] sm:$0xff]
        %v429 = vld [vmem:[%s178 + $0x2f8] sm:$0xff]
        %v430 = vld [vmem:[%s178 + $0x300] sm:$0xff]
        %v431 = vld [vmem:[%s178 + $0x308] sm:$0xff]
        %v432 = vld [vmem:[%s178 + $0x310] sm:$0xff]
        %v433 = vld [vmem:[%s178 + $0x318] sm:$0xff]
        %v434 = vld [vmem:[%s178 + $0x320] sm:$0xff]
        %v435 = vld [vmem:[%s178 + $0x328] sm:$0xff]
        %v436 = vld [vmem:[%s178 + $0x330] sm:$0xff]
        %v437 = vld [vmem:[%s178 + $0x338] sm:$0xff]
        %v438 = vld [vmem:[%s178 + $0x340] sm:$0xff]
        %v439 = vld [vmem:[%s178 + $0x348] sm:$0xff]
        %v440 = vld [vmem:[%s178 + $0x350] sm:$0xff]
        %v441 = vld [vmem:[%s178 + $0x358] sm:$0xff]
        %v442 = vld [vmem:[%s178 + $0x360] sm:$0xff]
        %v443 = vld [vmem:[%s178 + $0x368] sm:$0xff]
        %v444 = vld [vmem:[%s178 + $0x370] sm:$0xff]
        %v445 = vld [vmem:[%s178 + $0x378] sm:$0xff]
        %v446 = vld [vmem:[%s178 + $0x380] sm:$0xff]
        %v447 = vld [vmem:[%s178 + $0x388] sm:$0xff]
        %v448 = vld [vmem:[%s178 + $0x390] sm:$0xff]
        %v449 = vld [vmem:[%s178 + $0x398] sm:$0xff]
        %v450 = vld [vmem:[%s178 + $0x3a0] sm:$0xff]
        %v451 = vld [vmem:[%s178 + $0x3a8] sm:$0xff]
        %v452 = vld [vmem:[%s178 + $0x3b0] sm:$0xff]
        %v453 = vld [vmem:[%s178 + $0x3b8] sm:$0xff]
        %v454 = vld [vmem:[%s178 + $0x3c0] sm:$0xff]
        %v455 = vld [vmem:[%s178 + $0x3c8] sm:$0xff]
        %v456 = vld [vmem:[%s178 + $0x3d0] sm:$0xff]
        %v457 = vld [vmem:[%s178 + $0x3d8] sm:$0xff]
        %v458 = vld [vmem:[%s178 + $0x3e0] sm:$0xff]
        %v459 = vld [vmem:[%s178 + $0x3e8] sm:$0xff]
        %v460 = vld [vmem:[%s178 + $0x3f0] sm:$0xff]
        %v461 = vld [vmem:[%s178 + $0x3f8] sm:$0xff]
        %v462 = vsub.f32 %v206, %v334
        %v463 = vsub.f32 %v207, %v335
        %v464 = vsub.f32 %v208, %v336
        %v465 = vsub.f32 %v209, %v337
        %v466 = vsub.f32 %v210, %v338
        %v467 = vsub.f32 %v211, %v339
        %v468 = vsub.f32 %v212, %v340
        %v469 = vsub.f32 %v213, %v341
        %v470 = vsub.f32 %v214, %v342
        %v471 = vsub.f32 %v215, %v343
        %v472 = vsub.f32 %v216, %v344
        %v473 = vsub.f32 %v217, %v345
        %v474 = vsub.f32 %v218, %v346
        %v475 = vsub.f32 %v219, %v347
        %v476 = vsub.f32 %v220, %v348
        %v477 = vsub.f32 %v221, %v349
        %v478 = vsub.f32 %v222, %v350
        %v479 = vsub.f32 %v223, %v351
        %v480 = vsub.f32 %v224, %v352
        %v481 = vsub.f32 %v225, %v353
        %v482 = vsub.f32 %v226, %v354
        %v483 = vsub.f32 %v227, %v355
        %v484 = vsub.f32 %v228, %v356
        %v485 = vsub.f32 %v229, %v357
        %v486 = vsub.f32 %v230, %v358
        %v487 = vsub.f32 %v231, %v359
        %v488 = vsub.f32 %v232, %v360
        %v489 = vsub.f32 %v233, %v361
        %v490 = vsub.f32 %v234, %v362
        %v491 = vsub.f32 %v235, %v363
        %v492 = vsub.f32 %v236, %v364
        %v493 = vsub.f32 %v237, %v365
        %v494 = vsub.f32 %v238, %v366
        %v495 = vsub.f32 %v239, %v367
        %v496 = vsub.f32 %v240, %v368
        %v497 = vsub.f32 %v241, %v369
        %v498 = vsub.f32 %v242, %v370
        %v499 = vsub.f32 %v243, %v371
        %v500 = vsub.f32 %v244, %v372
        %v501 = vsub.f32 %v245, %v373
        %v502 = vsub.f32 %v246, %v374
        %v503 = vsub.f32 %v247, %v375
        %v504 = vsub.f32 %v248, %v376
        %v505 = vsub.f32 %v249, %v377
        %v506 = vsub.f32 %v250, %v378
        %v507 = vsub.f32 %v251, %v379
        %v508 = vsub.f32 %v252, %v380
        %v509 = vsub.f32 %v253, %v381
        %v510 = vsub.f32 %v254, %v382
        %v511 = vsub.f32 %v255, %v383
        %v512 = vsub.f32 %v256, %v384
        %v513 = vsub.f32 %v257, %v385
        %v514 = vsub.f32 %v258, %v386
        %v515 = vsub.f32 %v259, %v387
        %v516 = vsub.f32 %v260, %v388
        %v517 = vsub.f32 %v261, %v389
        %v518 = vsub.f32 %v262, %v390
        %v519 = vsub.f32 %v263, %v391
        %v520 = vsub.f32 %v264, %v392
        %v521 = vsub.f32 %v265, %v393
        %v522 = vsub.f32 %v266, %v394
        %v523 = vsub.f32 %v267, %v395
        %v524 = vsub.f32 %v268, %v396
        %v525 = vsub.f32 %v269, %v397
        %v526 = vsub.f32 %v270, %v398
        %v527 = vsub.f32 %v271, %v399
        %v528 = vsub.f32 %v272, %v400
        %v529 = vsub.f32 %v273, %v401
        %v530 = vsub.f32 %v274, %v402
        %v531 = vsub.f32 %v275, %v403
        %v532 = vsub.f32 %v276, %v404
        %v533 = vsub.f32 %v277, %v405
        %v534 = vsub.f32 %v278, %v406
        %v535 = vsub.f32 %v279, %v407
        %v536 = vsub.f32 %v280, %v408
        %v537 = vsub.f32 %v281, %v409
        %v538 = vsub.f32 %v282, %v410
        %v539 = vsub.f32 %v283, %v411
        %v540 = vsub.f32 %v284, %v412
        %v541 = vsub.f32 %v285, %v413
        %v542 = vsub.f32 %v286, %v414
        %v543 = vsub.f32 %v287, %v415
        %v544 = vsub.f32 %v288, %v416
        %v545 = vsub.f32 %v289, %v417
        %v546 = vsub.f32 %v290, %v418
        %v547 = vsub.f32 %v291, %v419
        %v548 = vsub.f32 %v292, %v420
        %v549 = vsub.f32 %v293, %v421
        %v550 = vsub.f32 %v294, %v422
        %v551 = vsub.f32 %v295, %v423
        %v552 = vsub.f32 %v296, %v424
        %v553 = vsub.f32 %v297, %v425
        %v554 = vsub.f32 %v298, %v426
        %v555 = vsub.f32 %v299, %v427
        %v556 = vsub.f32 %v300, %v428
        %v557 = vsub.f32 %v301, %v429
        %v558 = vsub.f32 %v302, %v430
        %v559 = vsub.f32 %v303, %v431
        %v560 = vsub.f32 %v304, %v432
        %v561 = vsub.f32 %v305, %v433
        %v562 = vsub.f32 %v306, %v434
        %v563 = vsub.f32 %v307, %v435
        %v564 = vsub.f32 %v308, %v436
        %v565 = vsub.f32 %v309, %v437
        %v566 = vsub.f32 %v310, %v438
        %v567 = vsub.f32 %v311, %v439
        %v568 = vsub.f32 %v312, %v440
        %v569 = vsub.f32 %v313, %v441
        %v570 = vsub.f32 %v314, %v442
        %v571 = vsub.f32 %v315, %v443
        %v572 = vsub.f32 %v316, %v444
        %v573 = vsub.f32 %v317, %v445
        %v574 = vsub.f32 %v318, %v446
        %v575 = vsub.f32 %v319, %v447
        %v576 = vsub.f32 %v320, %v448
        %v577 = vsub.f32 %v321, %v449
        %v578 = vsub.f32 %v322, %v450
        %v579 = vsub.f32 %v323, %v451
        %v580 = vsub.f32 %v324, %v452
        %v581 = vsub.f32 %v325, %v453
        %v582 = vsub.f32 %v326, %v454
        %v583 = vsub.f32 %v327, %v455
        %v584 = vsub.f32 %v328, %v456
        %v585 = vsub.f32 %v329, %v457
        %v586 = vsub.f32 %v330, %v458
        %v587 = vsub.f32 %v331, %v459
        %v588 = vsub.f32 %v332, %v460
        %v589 = vsub.f32 %v333, %v461
        %v590 = vmul.f32 %v462, %v462
        %v591 = vmul.f32 %v463, %v463
        %v592 = vmul.f32 %v464, %v464
        %v593 = vmul.f32 %v465, %v465
        %v594 = vmul.f32 %v466, %v466
        %v595 = vmul.f32 %v467, %v467
        %v596 = vmul.f32 %v468, %v468
        %v597 = vmul.f32 %v469, %v469
        %v598 = vmul.f32 %v470, %v470
        %v599 = vmul.f32 %v471, %v471
        %v600 = vmul.f32 %v472, %v472
        %v601 = vmul.f32 %v473, %v473
        %v602 = vmul.f32 %v474, %v474
        %v603 = vmul.f32 %v475, %v475
        %v604 = vmul.f32 %v476, %v476
        %v605 = vmul.f32 %v477, %v477
        %v606 = vmul.f32 %v478, %v478
        %v607 = vmul.f32 %v479, %v479
        %v608 = vmul.f32 %v480, %v480
        %v609 = vmul.f32 %v481, %v481
        %v610 = vmul.f32 %v482, %v482
        %v611 = vmul.f32 %v483, %v483
        %v612 = vmul.f32 %v484, %v484
        %v613 = vmul.f32 %v485, %v485
        %v614 = vmul.f32 %v486, %v486
        %v615 = vmul.f32 %v487, %v487
        %v616 = vmul.f32 %v488, %v488
        %v617 = vmul.f32 %v489, %v489
        %v618 = vmul.f32 %v490, %v490
        %v619 = vmul.f32 %v491, %v491
        %v620 = vmul.f32 %v492, %v492
        %v621 = vmul.f32 %v493, %v493
        %v622 = vmul.f32 %v494, %v494
        %v623 = vmul.f32 %v495, %v495
        %v624 = vmul.f32 %v496, %v496
        %v625 = vmul.f32 %v497, %v497
        %v626 = vmul.f32 %v498, %v498
        %v627 = vmul.f32 %v499, %v499
        %v628 = vmul.f32 %v500, %v500
        %v629 = vmul.f32 %v501, %v501
        %v630 = vmul.f32 %v502, %v502
        %v631 = vmul.f32 %v503, %v503
        %v632 = vmul.f32 %v504, %v504
        %v633 = vmul.f32 %v505, %v505
        %v634 = vmul.f32 %v506, %v506
        %v635 = vmul.f32 %v507, %v507
        %v636 = vmul.f32 %v508, %v508
        %v637 = vmul.f32 %v509, %v509
        %v638 = vmul.f32 %v510, %v510
        %v639 = vmul.f32 %v511, %v511
        %v640 = vmul.f32 %v512, %v512
        %v641 = vmul.f32 %v513, %v513
        %v642 = vmul.f32 %v514, %v514
        %v643 = vmul.f32 %v515, %v515
        %v644 = vmul.f32 %v516, %v516
        %v645 = vmul.f32 %v517, %v517
        %v646 = vmul.f32 %v518, %v518
        %v647 = vmul.f32 %v519, %v519
        %v648 = vmul.f32 %v520, %v520
        %v649 = vmul.f32 %v521, %v521
        %v650 = vmul.f32 %v522, %v522
        %v651 = vmul.f32 %v523, %v523
        %v652 = vmul.f32 %v524, %v524
        %v653 = vmul.f32 %v525, %v525
        %v654 = vmul.f32 %v526, %v526
        %v655 = vmul.f32 %v527, %v527
        %v656 = vmul.f32 %v528, %v528
        %v657 = vmul.f32 %v529, %v529
        %v658 = vmul.f32 %v530, %v530
        %v659 = vmul.f32 %v531, %v531
        %v660 = vmul.f32 %v532, %v532
        %v661 = vmul.f32 %v533, %v533
        %v662 = vmul.f32 %v534, %v534
        %v663 = vmul.f32 %v535, %v535
        %v664 = vmul.f32 %v536, %v536
        %v665 = vmul.f32 %v537, %v537
        %v666 = vmul.f32 %v538, %v538
        %v667 = vmul.f32 %v539, %v539
        %v668 = vmul.f32 %v540, %v540
        %v669 = vmul.f32 %v541, %v541
        %v670 = vmul.f32 %v542, %v542
        %v671 = vmul.f32 %v543, %v543
        %v672 = vmul.f32 %v544, %v544
        %v673 = vmul.f32 %v545, %v545
        %v674 = vmul.f32 %v546, %v546
        %v675 = vmul.f32 %v547, %v547
        %v676 = vmul.f32 %v548, %v548
        %v677 = vmul.f32 %v549, %v549
        %v678 = vmul.f32 %v550, %v550
        %v679 = vmul.f32 %v551, %v551
        %v680 = vmul.f32 %v552, %v552
        %v681 = vmul.f32 %v553, %v553
        %v682 = vmul.f32 %v554, %v554
        %v683 = vmul.f32 %v555, %v555
        %v684 = vmul.f32 %v556, %v556
        %v685 = vmul.f32 %v557, %v557
        %v686 = vmul.f32 %v558, %v558
        %v687 = vmul.f32 %v559, %v559
        %v688 = vmul.f32 %v560, %v560
        %v689 = vmul.f32 %v561, %v561
        %v690 = vmul.f32 %v562, %v562
        %v691 = vmul.f32 %v563, %v563
        %v692 = vmul.f32 %v564, %v564
        %v693 = vmul.f32 %v565, %v565
        %v694 = vmul.f32 %v566, %v566
        %v695 = vmul.f32 %v567, %v567
        %v696 = vmul.f32 %v568, %v568
        %v697 = vmul.f32 %v569, %v569
        %v698 = vmul.f32 %v570, %v570
        %v699 = vmul.f32 %v571, %v571
        %v700 = vmul.f32 %v572, %v572
        %v701 = vmul.f32 %v573, %v573
        %v702 = vmul.f32 %v574, %v574
        %v703 = vmul.f32 %v575, %v575
        %v704 = vmul.f32 %v576, %v576
        %v705 = vmul.f32 %v577, %v577
        %v706 = vmul.f32 %v578, %v578
        %v707 = vmul.f32 %v579, %v579
        %v708 = vmul.f32 %v580, %v580
        %v709 = vmul.f32 %v581, %v581
        %v710 = vmul.f32 %v582, %v582
        %v711 = vmul.f32 %v583, %v583
        %v712 = vmul.f32 %v584, %v584
        %v713 = vmul.f32 %v585, %v585
        %v714 = vmul.f32 %v586, %v586
        %v715 = vmul.f32 %v587, %v587
        %v716 = vmul.f32 %v588, %v588
        %v717 = vmul.f32 %v589, %v589
        %v718 = vadd.f32 %v590, %v591
        %v719 = vadd.f32 %v718, %v592
        %v720 = vadd.f32 %v719, %v593
        %v721 = vadd.f32 %v720, %v594
        %v722 = vadd.f32 %v721, %v595
        %v723 = vadd.f32 %v722, %v596
        %v724 = vadd.f32 %v723, %v597
        %v725 = vadd.f32 %v724, %v598
        %v726 = vadd.f32 %v725, %v599
        %v727 = vadd.f32 %v726, %v600
        %v728 = vadd.f32 %v727, %v601
        %v729 = vadd.f32 %v728, %v602
        %v730 = vadd.f32 %v729, %v603
        %v731 = vadd.f32 %v730, %v604
        %v732 = vadd.f32 %v731, %v605
        %v733 = vadd.f32 %v732, %v606
        %v734 = vadd.f32 %v733, %v607
        %v735 = vadd.f32 %v734, %v608
        %v736 = vadd.f32 %v735, %v609
        %v737 = vadd.f32 %v736, %v610
        %v738 = vadd.f32 %v737, %v611
        %v739 = vadd.f32 %v738, %v612
        %v740 = vadd.f32 %v739, %v613
        %v741 = vadd.f32 %v740, %v614
        %v742 = vadd.f32 %v741, %v615
        %v743 = vadd.f32 %v742, %v616
        %v744 = vadd.f32 %v743, %v617
        %v745 = vadd.f32 %v744, %v618
        %v746 = vadd.f32 %v745, %v619
        %v747 = vadd.f32 %v746, %v620
        %v748 = vadd.f32 %v747, %v621
        %v749 = vadd.f32 %v748, %v622
        %v750 = vadd.f32 %v749, %v623
        %v751 = vadd.f32 %v750, %v624
        %v752 = vadd.f32 %v751, %v625
        %v753 = vadd.f32 %v752, %v626
        %v754 = vadd.f32 %v753, %v627
        %v755 = vadd.f32 %v754, %v628
        %v756 = vadd.f32 %v755, %v629
        %v757 = vadd.f32 %v756, %v630
        %v758 = vadd.f32 %v757, %v631
        %v759 = vadd.f32 %v758, %v632
        %v760 = vadd.f32 %v759, %v633
        %v761 = vadd.f32 %v760, %v634
        %v762 = vadd.f32 %v761, %v635
        %v763 = vadd.f32 %v762, %v636
        %v764 = vadd.f32 %v763, %v637
        %v765 = vadd.f32 %v764, %v638
        %v766 = vadd.f32 %v765, %v639
        %v767 = vadd.f32 %v766, %v640
        %v768 = vadd.f32 %v767, %v641
        %v769 = vadd.f32 %v768, %v642
        %v770 = vadd.f32 %v769, %v643
        %v771 = vadd.f32 %v770, %v644
        %v772 = vadd.f32 %v771, %v645
        %v773 = vadd.f32 %v772, %v646
        %v774 = vadd.f32 %v773, %v647
        %v775 = vadd.f32 %v774, %v648
        %v776 = vadd.f32 %v775, %v649
        %v777 = vadd.f32 %v776, %v650
        %v778 = vadd.f32 %v777, %v651
        %v779 = vadd.f32 %v778, %v652
        %v780 = vadd.f32 %v779, %v653
        %v781 = vadd.f32 %v780, %v654
        %v782 = vadd.f32 %v781, %v655
        %v783 = vadd.f32 %v782, %v656
        %v784 = vadd.f32 %v783, %v657
        %v785 = vadd.f32 %v784, %v658
        %v786 = vadd.f32 %v785, %v659
        %v787 = vadd.f32 %v786, %v660
        %v788 = vadd.f32 %v787, %v661
        %v789 = vadd.f32 %v788, %v662
        %v790 = vadd.f32 %v789, %v663
        %v791 = vadd.f32 %v790, %v664
        %v792 = vadd.f32 %v791, %v665
        %v793 = vadd.f32 %v792, %v666
        %v794 = vadd.f32 %v793, %v667
        %v795 = vadd.f32 %v794, %v668
        %v796 = vadd.f32 %v795, %v669
        %v797 = vadd.f32 %v796, %v670
        %v798 = vadd.f32 %v797, %v671
        %v799 = vadd.f32 %v798, %v672
        %v800 = vadd.f32 %v799, %v673
        %v801 = vadd.f32 %v800, %v674
        %v802 = vadd.f32 %v801, %v675
        %v803 = vadd.f32 %v802, %v676
        %v804 = vadd.f32 %v803, %v677
        %v805 = vadd.f32 %v804, %v678
        %v806 = vadd.f32 %v805, %v679
        %v807 = vadd.f32 %v806, %v680
        %v808 = vadd.f32 %v807, %v681
        %v809 = vadd.f32 %v808, %v682
        %v810 = vadd.f32 %v809, %v683
        %v811 = vadd.f32 %v810, %v684
        %v812 = vadd.f32 %v811, %v685
        %v813 = vadd.f32 %v812, %v686
        %v814 = vadd.f32 %v813, %v687
        %v815 = vadd.f32 %v814, %v688
        %v816 = vadd.f32 %v815, %v689
        %v817 = vadd.f32 %v816, %v690
        %v818 = vadd.f32 %v817, %v691
        %v819 = vadd.f32 %v818, %v692
        %v820 = vadd.f32 %v819, %v693
        %v821 = vadd.f32 %v820, %v694
        %v822 = vadd.f32 %v821, %v695
        %v823 = vadd.f32 %v822, %v696
        %v824 = vadd.f32 %v823, %v697
        %v825 = vadd.f32 %v824, %v698
        %v826 = vadd.f32 %v825, %v699
        %v827 = vadd.f32 %v826, %v700
        %v828 = vadd.f32 %v827, %v701
        %v829 = vadd.f32 %v828, %v702
        %v830 = vadd.f32 %v829, %v703
        %v831 = vadd.f32 %v830, %v704
        %v832 = vadd.f32 %v831, %v705
        %v833 = vadd.f32 %v832, %v706
        %v834 = vadd.f32 %v833, %v707
        %v835 = vadd.f32 %v834, %v708
        %v836 = vadd.f32 %v835, %v709
        %v837 = vadd.f32 %v836, %v710
        %v838 = vadd.f32 %v837, %v711
        %v839 = vadd.f32 %v838, %v712
        %v840 = vadd.f32 %v839, %v713
        %v841 = vadd.f32 %v840, %v714
        %v842 = vadd.f32 %v841, %v715
        %v843 = vadd.f32 %v842, %v716
        %v844 = vadd.f32 %v843, %v717
        %845 = vadd.xlane.f32.xlu0 %v844
        %v846 = vpop.xlane.xlu0 %845
        %v847 = vrot.slane %v846, 4
        %v848 = vadd.f32 %v846, %v847
        %v849 = vrot.slane %v848, 2
        %v850 = vadd.f32 %v848, %v849
        %v851 = vrot.slane %v850, 1
        %v852 = vadd.f32 %v850, %v851
        %s853 = vtos %v852
        %v854 = vstv %s853
        %855 = vst [vmem:[%s203] sm:$0xff] %v854
        %s856 = sand.u32 %s82, 1
        %s857 = scalar_lea.sflag [#allocation4], %s856
        %s858 = sand.u32 %s82, 1
        %s859 = smul.addr %s858, 8
        %s860 = scalar_lea.vmem [#allocation7], %s859
        // Predicated region
        $region37: #{tpu_custom_call.1} parent=27 // pred_check
          %p861 = pneg %p92
        $region38: #{tpu_custom_call.1} parent=27 // pred_check_branch
          %863 = sbr.rel (%p861) target = $region40
        $region39: #{tpu_custom_call.1} parent=27 // pred_region
          %s865 = ssub.s32 128, 128
          %866 = vsyncadd %s857, %s865
          %s867 = smul.addr %s22, 128
          %s868 = scalar_lea.hbm %s2, %s867
          %s870 = sshll.u32 %s860, 4
          %s871 = int_to_ptr.vmem [resolvable:$true] %s870
          %873 = dma.vmem_to_hbm [thread:$0]  %s871, 128, %s868, %s857
        $region40: #{tpu_custom_call.1} parent=27 // pred_fallthru
          _
      $region28: #{tpu_custom_call.1} parent=5 // pred_fallthru
        _
      %p874 = scmp.le.s32.totalorder 2, %s17
      // Predicated region
      $region41: #{tpu_custom_call.1} parent=5 // pred_check
        %p875 = pneg %p874
      $region42: #{tpu_custom_call.1} parent=5 // pred_check_branch
        %877 = sbr.rel (%p875) target = $region44
      $region43: #{tpu_custom_call.1} parent=5 // pred_region
        %s878 = ssub.s32 %s17, 2
        // Predicated region
        $region45: #{tpu_custom_call.1} parent=43 // pred_check
          %p879 = pneg %p98
        $region46: #{tpu_custom_call.1} parent=43 // pred_check_branch
          %881 = sbr.rel (%p879) target = $region48
        $region47: #{tpu_custom_call.1} parent=43 // pred_region
          %s882 = sand.u32 %s83, 1
          %s883 = scalar_lea.sflag [#allocation4], %s882
          %s884 = sand.u32 %s83, 1
          %s885 = smul.addr %s884, 8
          %s886 = scalar_lea.vmem [#allocation7], %s885
          %887 = dma.done %s883, 128
        $region48: #{tpu_custom_call.1} parent=43 // pred_fallthru
          _
      $region44: #{tpu_custom_call.1} parent=5 // pred_fallthru
        _
    $region6: #{tpu_custom_call.1} parent=1 // loop_footer
      %s21 = sadd.s32 1, %s17
    $region7: #{tpu_custom_call.1} parent=1 // loop_footer_branch
      %16 = sbr.rel target = $region3
    $region8: #{tpu_custom_call.1} parent=1 // loop_exit
      _
    %888 = vsyncpa [#allocation3], 1
    %s889 = scalar_lea.sflag [#allocation3], 1
    %890 = vsyncpa %s889, 1
    %891 = vsyncpa [#allocation6], 1
    %s892 = scalar_lea.sflag [#allocation6], 1
    %893 = vsyncpa %s892, 1
    %894 = vsyncpa [#allocation4], 1
    %s895 = scalar_lea.sflag [#allocation4], 1
    %896 = vsyncpa %s895, 1

</llo_original>
